<compile_context>
chip_gen: v7x
topology: tpu7x:2x2x1
jax: 0.10.0
libtpu: 0.0.40
codegen_flags: <defaults>
</compile_context>

<pallas_src>
import numpy as np
import jax
import jax.numpy as jnp
from jax.experimental import pallas as pl
from jax.experimental.pallas import tpu as pltpu


def _round_up(x: int, m: int) -> int:
    return ((x + m - 1) // m) * m


# -----------------------------------------------------------------------------
# Parameter preparation — run ONCE at setup time, not per forward call.
# -----------------------------------------------------------------------------
def prepare_params(w1, b1, w2, b2, *, compute_dtype=jnp.float32):
    """Pad hidden/action dims to multiples of 128 and cast matmul weights."""
    S, H = w1.shape
    A = w2.shape[1]
    Hp = _round_up(H, 128)
    Ap = _round_up(A, 128)
    return {
        "w1": jnp.pad(w1, ((0, 0), (0, Hp - H))).astype(compute_dtype),
        "b1": jnp.pad(b1.reshape(1, -1), ((0, 0), (0, Hp - H))).astype(jnp.float32),
        "w2": jnp.pad(w2, ((0, Hp - H), (0, Ap - A))).astype(compute_dtype),
        "b2": jnp.pad(b2.reshape(1, -1), ((0, 0), (0, Ap - A))).astype(jnp.float32),
        "n_actions": A,
    }


# -----------------------------------------------------------------------------
# Kernels
# -----------------------------------------------------------------------------
def _q_select_kernel(state_ref, action_ref, w1_ref, b1_ref, w2_ref, b2_ref,
                     out_ref):
    # state_ref  : [tb, S]  f32   (streamed)
    # action_ref : [tb, 1]  int32 (streamed)
    # w1_ref     : [S, Hp]  compute dtype (VMEM-resident, constant index_map)
    # b1_ref     : [1, Hp]  f32
    # w2_ref     : [Hp, Ap] compute dtype (VMEM-resident)
    # b2_ref     : [1, Ap]  f32
    # out_ref    : [tb, 1]  f32  -> Q(state, action)
    x = state_ref[...].astype(w1_ref.dtype)              # in-kernel cast (no wrapper pass)

    h = jnp.dot(x, w1_ref[...], preferred_element_type=jnp.float32)
    h = jnp.maximum(h + b1_ref[...], 0.0)                # f32 epilogue (v5e-safe)

    q = jnp.dot(h.astype(w2_ref.dtype), w2_ref[...],
                preferred_element_type=jnp.float32) + b2_ref[...]   # [tb, Ap] f32

    # One-hot select of the taken action's Q-value.  Padded columns of w2/b2
    # are zero, and out-of-range actions produce an all-zero mask -> 0.0
    # (matches (q * one_hot(action)).sum(1) semantics).
    col = jax.lax.broadcasted_iota(jnp.int32, q.shape, 1)            # lane iota
    sel = jnp.where(col == action_ref[...], q, 0.0)                  # [tb,1] bcast over lanes
    out_ref[...] = jnp.sum(sel, axis=1, keepdims=True)               # [tb, 1]


def _q_values_kernel(state_ref, w1_ref, b1_ref, w2_ref, b2_ref, q_ref):
    # Full q-values path (for values / max / argmax); lane-dense [tb, Ap] output.
    x = state_ref[...].astype(w1_ref.dtype)
    h = jnp.dot(x, w1_ref[...], preferred_element_type=jnp.float32)
    h = jnp.maximum(h + b1_ref[...], 0.0)
    q = jnp.dot(h.astype(w2_ref.dtype), w2_ref[...],
                preferred_element_type=jnp.float32) + b2_ref[...]
    q_ref[...] = q.astype(q_ref.dtype)


# -----------------------------------------------------------------------------
# Tiling helper: large tiles (amortize ~0.35us/step), >=2 tiles for v7x's two
# TensorCores, gated by an explicit VMEM budget (double-buffered streams +
# resident weights must fit the 32 MiB default scoped VMEM with headroom).
# -----------------------------------------------------------------------------
def _pick_tile(B, tile_b, per_row_stream_bytes, weight_bytes,
               vmem_budget=28 * 1024 * 1024):
    tb = min(_round_up(tile_b, 8), _round_up(B, 8))
    if B > 8:  # guarantee >=2 grid tiles so ("parallel",) shards over 2 TCs (v7x)
        tb = min(tb, _round_up(pl.cdiv(B, 2), 8))
    while tb > 8 and 2 * tb * per_row_stream_bytes + 2 * weight_bytes > vmem_budget:
        tb = max(8, _round_up(tb // 2, 8))
    return tb


def _weight_bytes(params):
    w1, b1, w2, b2 = params["w1"], params["b1"], params["w2"], params["b2"]
    return sum(int(a.size) * a.dtype.itemsize for a in (w1, b1, w2, b2))


# -----------------------------------------------------------------------------
# Wrappers
# -----------------------------------------------------------------------------
def qfunction_forward(state, action, params, *, tile_b=1024,
                      single_buffer_weights=False):
    """Q(s, a): state [B, S] f32, action [B] int -> [B] f32 (fused gather)."""
    w1_p, b1_p, w2_p, b2_p = params["w1"], params["b1"], params["w2"], params["b2"]
    B, S = state.shape
    Hp = w1_p.shape[1]
    Ap = w2_p.shape[1]

    wbytes = _weight_bytes(params)
    tb = _pick_tile(B, tile_b, per_row_stream_bytes=S * 4 + 8, weight_bytes=wbytes)
    grid = (pl.cdiv(B, tb),)

    # For large S/H (v7x 32 MiB scoped VMEM): single-buffer the resident weights.
    wmode = dict(pipeline_mode=pl.Buffered(1)) if single_buffer_weights else {}

    action_col = action.astype(jnp.int32).reshape(B, 1)   # tiny (B int32s)

    cost = pl.CostEstimate(
        flops=2 * B * (S * Hp + Hp * Ap),
        transcendentals=0,
        bytes_accessed=B * (S * 4 + 4 + 4) + wbytes,
    )

    out = pl.pallas_call(
        _q_select_kernel,
        out_shape=jax.ShapeDtypeStruct((B, 1), jnp.float32),
        grid_spec=pltpu.PrefetchScalarGridSpec(
            num_scalar_prefetch=0,
            grid=grid,
            in_specs=[
                pl.BlockSpec((tb, S), lambda i: (i, 0)),            # state: streamed
                pl.BlockSpec((tb, 1), lambda i: (i, 0)),            # action: streamed
                pl.BlockSpec((S, Hp), lambda i: (0, 0), **wmode),   # w1: resident
                pl.BlockSpec((1, Hp), lambda i: (0, 0), **wmode),   # b1: resident
                pl.BlockSpec((Hp, Ap), lambda i: (0, 0), **wmode),  # w2: resident
                pl.BlockSpec((1, Ap), lambda i: (0, 0), **wmode),   # b2: resident
            ],
            out_specs=pl.BlockSpec((tb, 1), lambda i: (i, 0)),
        ),
        compiler_params=pltpu.CompilerParams(
            dimension_semantics=("parallel",),
        ),
        cost_estimate=cost,
    )(state, action_col, w1_p, b1_p, w2_p, b2_p)
    return out[:, 0]


def qfunction_values(state, params, *, tile_b=1024, out_dtype=jnp.float32,
                     single_buffer_weights=False):
    """Full q-values [B, A] (for values / max / argmax). out_dtype=bfloat16
    halves the dominant HBM write stream if the caller tolerates it (v5e)."""
    w1_p, b1_p, w2_p, b2_p = params["w1"], params["b1"], params["w2"], params["b2"]
    A = params["n_actions"]
    B, S = state.shape
    Hp = w1_p.shape[1]
    Ap = w2_p.shape[1]

    wbytes = _weight_bytes(params)
    out_isize = jnp.dtype(out_dtype).itemsize
    tb = _pick_tile(B, tile_b, per_row_stream_bytes=S * 4 + Ap * out_isize,
                    weight_bytes=wbytes)
    grid = (pl.cdiv(B, tb),)
    wmode = dict(pipeline_mode=pl.Buffered(1)) if single_buffer_weights else {}

    q = pl.pallas_call(
        _q_values_kernel,
        out_shape=jax.ShapeDtypeStruct((B, Ap), out_dtype),
        grid_spec=pltpu.PrefetchScalarGridSpec(
            num_scalar_prefetch=0,
            grid=grid,
            in_specs=[
                pl.BlockSpec((tb, S), lambda i: (i, 0)),
                pl.BlockSpec((S, Hp), lambda i: (0, 0), **wmode),
                pl.BlockSpec((1, Hp), lambda i: (0, 0), **wmode),
                pl.BlockSpec((Hp, Ap), lambda i: (0, 0), **wmode),
                pl.BlockSpec((1, Ap), lambda i: (0, 0), **wmode),
            ],
            out_specs=pl.BlockSpec((tb, Ap), lambda i: (i, 0)),
        ),
        compiler_params=pltpu.CompilerParams(
            dimension_semantics=("parallel",),
        ),
    )(state, w1_p, b1_p, w2_p, b2_p)
    return q[:, :A]


def make_params(key, state_dim, hidden_dim, n_actions):
    """Deterministic synthetic parameters (uniform, like torch Linear init)."""
    k1, k2, k3, k4 = jax.random.split(key, 4)
    lim1 = 1.0 / np.sqrt(state_dim)
    lim2 = 1.0 / np.sqrt(hidden_dim)
    w1 = jax.random.uniform(k1, (state_dim, hidden_dim), jnp.float32, -lim1, lim1)
    b1 = jax.random.uniform(k2, (hidden_dim,), jnp.float32, -lim1, lim1)
    w2 = jax.random.uniform(k3, (hidden_dim, n_actions), jnp.float32, -lim2, lim2)
    b2 = jax.random.uniform(k4, (n_actions,), jnp.float32, -lim2, lim2)
    return w1, b1, w2, b2


if __name__ == "__main__":
    # Small shapes consistent with the module: fc2 has 2 outputs, so the
    # one-hot must also have 2 classes -> n_actions = 2.
    B, STATE_DIM, HIDDEN_DIM, N_ACTIONS = 8, 4, 32, 2

    key = jax.random.PRNGKey(0)
    k_state, k_action, k_params = jax.random.split(key, 3)

    state = jax.random.normal(k_state, (B, STATE_DIM), jnp.float32)
    action = jax.random.randint(k_action, (B,), 0, N_ACTIONS, jnp.int32)
    w1, b1, w2, b2 = make_params(k_params, STATE_DIM, HIDDEN_DIM, N_ACTIONS)

    # Pure-JAX reference of the same forward semantics.
    h_ref = jnp.maximum(state @ w1 + b1, 0.0)
    q_ref = h_ref @ w2 + b2
    ref = jnp.sum(q_ref * jax.nn.one_hot(action, N_ACTIONS, dtype=q_ref.dtype), axis=1)

    # f32 path (exact vs. reference).  Params are prepared ONCE.
    params_f32 = prepare_params(w1, b1, w2, b2, compute_dtype=jnp.float32)
    out = jax.block_until_ready(qfunction_forward(state, action, params_f32))
    np.testing.assert_allclose(np.asarray(out), np.asarray(ref), rtol=1e-5, atol=1e-5)

    # Full q-values path (values/max/argmax).
    qv = jax.block_until_ready(qfunction_values(state, params_f32))
    np.testing.assert_allclose(np.asarray(qv), np.asarray(q_ref), rtol=1e-5, atol=1e-5)

    # bf16 matmul path (f32 accumulate / epilogue) — loose tolerance smoke test.
    params_bf16 = prepare_params(w1, b1, w2, b2, compute_dtype=jnp.bfloat16)
    out_bf16 = jax.block_until_ready(qfunction_forward(state, action, params_bf16))
    np.testing.assert_allclose(np.asarray(out_bf16), np.asarray(ref),
                               rtol=5e-2, atol=5e-2)

    print("KERNEL_OK")
</pallas_src>

<mosaic_0001>
module attributes {stable_mosaic.version = 11 : i64} {
  func.func @_q_select_kernel(%arg0: i32, %arg1: memref<8x4xf32, #tpu.memory_space<vmem>>, %arg2: memref<8x1xi32, #tpu.memory_space<vmem>>, %arg3: memref<4x128xf32, #tpu.memory_space<vmem>>, %arg4: memref<1x128xf32, #tpu.memory_space<vmem>>, %arg5: memref<128x128xf32, #tpu.memory_space<vmem>>, %arg6: memref<1x128xf32, #tpu.memory_space<vmem>>, %arg7: memref<8x1xf32, #tpu.memory_space<vmem>>) attributes {dimension_semantics = [#tpu.dimension_semantics<parallel>], iteration_bounds = array<i64: 1>, scalar_prefetch = 0 : i64, scratch_operands = 0 : i64, tpu.core_type = #tpu.core_type<tc>, window_params = [{transform_indices = @transform_0, window_bounds = array<i64: 8, 4>}, {transform_indices = @transform_1, window_bounds = array<i64: 8, 1>}, {pipeline_mode = #tpu.pipeline_mode<synchronous>, transform_indices = @transform_2, window_bounds = array<i64: 4, 128>}, {pipeline_mode = #tpu.pipeline_mode<synchronous>, transform_indices = @transform_3, window_bounds = array<i64: 1, 128>}, {pipeline_mode = #tpu.pipeline_mode<synchronous>, transform_indices = @transform_4, window_bounds = array<i64: 128, 128>}, {pipeline_mode = #tpu.pipeline_mode<synchronous>, transform_indices = @transform_5, window_bounds = array<i64: 1, 128>}, {transform_indices = @transform_6, window_bounds = array<i64: 8, 1>}]} {
    %c0 = arith.constant 0 : index
    %c0_0 = arith.constant 0 : index
    %0 = vector.load %arg1[%c0, %c0_0] : memref<8x4xf32, #tpu.memory_space<vmem>>, vector<8x4xf32>
    %c0_1 = arith.constant 0 : index
    %c0_2 = arith.constant 0 : index
    %1 = vector.load %arg3[%c0_1, %c0_2] : memref<4x128xf32, #tpu.memory_space<vmem>>, vector<4x128xf32>
    %cst = arith.constant dense<0.000000e+00> : vector<8x128xf32>
    %2 = tpu.matmul %0, %1, %cst {dimension_numbers = #tpu.dot_dimension_numbers<[1], [0], [0], [1], [0, 0, 1, 1], [], []>} : vector<8x4xf32>, vector<4x128xf32>, vector<8x128xf32> -> vector<8x128xf32>
    %c0_3 = arith.constant 0 : index
    %c0_4 = arith.constant 0 : index
    %3 = vector.load %arg4[%c0_3, %c0_4] : memref<1x128xf32, #tpu.memory_space<vmem>>, vector<1x128xf32>
    %4 = vector.broadcast %3 : vector<1x128xf32> to vector<8x128xf32>
    %5 = arith.addf %2, %4 : vector<8x128xf32>
    %cst_5 = arith.constant 0.000000e+00 : f32
    %6 = vector.broadcast %cst_5 : f32 to vector<8x128xf32>
    %7 = arith.maximumf %5, %6 : vector<8x128xf32>
    %c0_6 = arith.constant 0 : index
    %c0_7 = arith.constant 0 : index
    %8 = vector.load %arg5[%c0_6, %c0_7] : memref<128x128xf32, #tpu.memory_space<vmem>>, vector<128x128xf32>
    %cst_8 = arith.constant dense<0.000000e+00> : vector<8x128xf32>
    %9 = tpu.matmul %7, %8, %cst_8 {dimension_numbers = #tpu.dot_dimension_numbers<[1], [0], [0], [1], [0, 0, 1, 1], [], []>} : vector<8x128xf32>, vector<128x128xf32>, vector<8x128xf32> -> vector<8x128xf32>
    %c0_9 = arith.constant 0 : index
    %c0_10 = arith.constant 0 : index
    %10 = vector.load %arg6[%c0_9, %c0_10] : memref<1x128xf32, #tpu.memory_space<vmem>>, vector<1x128xf32>
    %11 = vector.broadcast %10 : vector<1x128xf32> to vector<8x128xf32>
    %12 = arith.addf %9, %11 : vector<8x128xf32>
    %13 = tpu.iota {dimensions = array<i32: 1>} : vector<8x128xi32>
    %c0_11 = arith.constant 0 : index
    %c0_12 = arith.constant 0 : index
    %14 = vector.load %arg2[%c0_11, %c0_12] : memref<8x1xi32, #tpu.memory_space<vmem>>, vector<8x1xi32>
    %15 = vector.broadcast %14 : vector<8x1xi32> to vector<8x128xi32>
    %16 = arith.cmpi eq, %13, %15 : vector<8x128xi32>
    %cst_13 = arith.constant 0.000000e+00 : f32
    %17 = vector.broadcast %cst_13 : f32 to vector<8x128xf32>
    %18 = arith.select %16, %12, %17 : vector<8x128xi1>, vector<8x128xf32>
    %cst_14 = arith.constant dense<0.000000e+00> : vector<8xf32>
    %19 = vector.multi_reduction <add>, %18, %cst_14 [1] : vector<8x128xf32> to vector<8xf32>
    %20 = vector.shape_cast %19 : vector<8xf32> to vector<8x1xf32>
    %c0_15 = arith.constant 0 : index
    %c0_16 = arith.constant 0 : index
    %21 = vector.load %arg7[%c0_15, %c0_16] : memref<8x1xf32, #tpu.memory_space<vmem>>, vector<8x1xf32>
    tpu.vector_store %arg7[%c0_15, %c0_16], %20 {strides = array<i32>} : memref<8x1xf32, #tpu.memory_space<vmem>>, vector<8x1xf32>,
    return
  }
  func.func @transform_0(%arg0: i32) -> (i32, i32) {
    %c0_i32 = arith.constant 0 : i32
    %c0_i32_0 = arith.constant 0 : i32
    return %arg0, %c0_i32 : i32, i32
  }
  func.func @transform_1(%arg0: i32) -> (i32, i32) {
    %c0_i32 = arith.constant 0 : i32
    %c0_i32_0 = arith.constant 0 : i32
    return %arg0, %c0_i32 : i32, i32
  }
  func.func @transform_2(%arg0: i32) -> (i32, i32) {
    %c0_i32 = arith.constant 0 : i32
    %c0_i32_0 = arith.constant 0 : i32
    %c0_i32_1 = arith.constant 0 : i32
    return %c0_i32, %c0_i32_0 : i32, i32
  }
  func.func @transform_3(%arg0: i32) -> (i32, i32) {
    %c0_i32 = arith.constant 0 : i32
    %c0_i32_0 = arith.constant 0 : i32
    %c0_i32_1 = arith.constant 0 : i32
    return %c0_i32, %c0_i32_0 : i32, i32
  }
  func.func @transform_4(%arg0: i32) -> (i32, i32) {
    %c0_i32 = arith.constant 0 : i32
    %c0_i32_0 = arith.constant 0 : i32
    %c0_i32_1 = arith.constant 0 : i32
    return %c0_i32, %c0_i32_0 : i32, i32
  }
  func.func @transform_5(%arg0: i32) -> (i32, i32) {
    %c0_i32 = arith.constant 0 : i32
    %c0_i32_0 = arith.constant 0 : i32
    %c0_i32_1 = arith.constant 0 : i32
    return %c0_i32, %c0_i32_0 : i32, i32
  }
  func.func @transform_6(%arg0: i32) -> (i32, i32) {
    %c0_i32 = arith.constant 0 : i32
    %c0_i32_0 = arith.constant 0 : i32
    return %arg0, %c0_i32 : i32, i32
  }
}

</mosaic_0001>

<llo_original>
// kernel: tpu_custom_call.1
$region0: #{tpu_custom_call.1}
  #allocation0 [shape = 'u32[]', space=smem, size = 0x4, offset = 0x4, fixed_abs, tag = 'smem constant byte address 0x4 - core index']
  #allocation1 [shape = 'u32[144,128]{1,0:T(1,128)}', space=vmem, size = 0x12000, scoped, tag = 'internal scratch']
  %s0 = inlined_call_operand.vmem [shape: f32[8,4], index: 0, kind: input, shape index: {}]
  %s1 = inlined_call_operand.vmem [shape: s32[8,1], index: 1, kind: input, shape index: {}]
  %s2 = inlined_call_operand.vmem [shape: f32[4,128], index: 2, kind: input, shape index: {}]
  %s3 = inlined_call_operand.vmem [shape: f32[1,128], index: 3, kind: input, shape index: {}]
  %s4 = inlined_call_operand.hbm [shape: f32[128,128], index: 4, kind: input, shape index: {}]
  %s5 = inlined_call_operand.vmem [shape: f32[1,128], index: 5, kind: input, shape index: {}]
  %s6 = inlined_call_operand.vmem [shape: f32[8,1], index: 6, kind: output, shape index: {}]
  %s7 = sld [smem:[#allocation0]]
  $region38: #{tpu_custom_call.1} parent=0
    _
  %s9 = ssub.s32 1, %s7
  %s10 = scalar_select 0, %s9, %s7
  $region1: #{tpu_custom_call.1} parent=0
    #allocation2 [shape = 'u8[65536]{0}', space=vmem, size = 0x10000, scoped, tag = 'input window, operand 4, single buffered']
    #allocation3 [shape = 's32[1]{0}', space=sflag, size = 0x4, scoped, tag = 'scoped memory for tpu_custom_call.1']
    %11 = vsyncpa [#allocation3], 0
    // Predicated region
    $region2: #{tpu_custom_call.1} parent=1 // pred_check
      _
    $region3: #{tpu_custom_call.1} parent=1 // pred_check_branch
      %13 = sbr.rel (0) target = $region5
    $region4: #{tpu_custom_call.1} parent=1 // pred_region
      _
    $region5: #{tpu_custom_call.1} parent=1 // pred_fallthru
      _
    // Predicated region
    $region6: #{tpu_custom_call.1} parent=1 // pred_check
      _
    $region7: #{tpu_custom_call.1} parent=1 // pred_check_branch
      %15 = sbr.rel (0) target = $region9
    $region8: #{tpu_custom_call.1} parent=1 // pred_region
      _
    $region9: #{tpu_custom_call.1} parent=1 // pred_fallthru
      _
    // Predicated region
    $region10: #{tpu_custom_call.1} parent=1 // pred_check
      _
    $region11: #{tpu_custom_call.1} parent=1 // pred_check_branch
      %17 = sbr.rel (0) target = $region13
    $region12: #{tpu_custom_call.1} parent=1 // pred_region
      _
    $region13: #{tpu_custom_call.1} parent=1 // pred_fallthru
      _
    // Predicated region
    $region14: #{tpu_custom_call.1} parent=1 // pred_check
      _
    $region15: #{tpu_custom_call.1} parent=1 // pred_check_branch
      %19 = sbr.rel (0) target = $region17
    $region16: #{tpu_custom_call.1} parent=1 // pred_region
      _
    $region17: #{tpu_custom_call.1} parent=1 // pred_fallthru
      _
    // Predicated region
    $region18: #{tpu_custom_call.1} parent=1 // pred_check
      _
    $region19: #{tpu_custom_call.1} parent=1 // pred_check_branch
      %21 = sbr.rel (0) target = $region21
    $region20: #{tpu_custom_call.1} parent=1 // pred_region
      %s23 = ssub.s32 2048, 2048
      %24 = vsyncadd [#allocation3], %s23
      %s25 = sshll.u32 [#allocation2], 4
      %s26 = int_to_ptr.vmem [resolvable:$true] %s25
      %31 = dma.hbm_to_vmem [thread:$0]  %s4, 2048, %s26, [#allocation3], 128, 128, 8
    $region21: #{tpu_custom_call.1} parent=1 // pred_fallthru
      _
    // Predicated region
    $region22: #{tpu_custom_call.1} parent=1 // pred_check
      _
    $region23: #{tpu_custom_call.1} parent=1 // pred_check_branch
      %33 = sbr.rel (0) target = $region25
    $region24: #{tpu_custom_call.1} parent=1 // pred_region
      _
    $region25: #{tpu_custom_call.1} parent=1 // pred_fallthru
      _
    // Predicated region
    $region26: #{tpu_custom_call.1} parent=1 // pred_check
      _
    $region27: #{tpu_custom_call.1} parent=1 // pred_check_branch
      %35 = sbr.rel (0) target = $region29
    $region28: #{tpu_custom_call.1} parent=1 // pred_region
      %36 = dma.done [#allocation3], 2048
    $region29: #{tpu_custom_call.1} parent=1 // pred_fallthru
      _
    %v37 = vld [vmem:[%s0] sm:$0xff]
    %v38 = vld [vmem:[%s2] sm:$0xf]
    %v39 = vld [vmem:[%s3] sm:$0x1]
    %v41 = vlaneseq
    %v42 = vshrl.u32 %v41, 7
    %v43 = vsub.s32 0, %v42
    %v44 = vrot.slane %v39, %v43
    %vm46 = vcmask 31744
    %v48 = vsel %vm46, %v37, 0
    %vm50 = vcmask 1043456
    %v52 = vsel %vm50, %v38, 0
    %54 = vmatprep.subr.mxu0 0.0
    %55 = vmatpush1.msra.mxu0 %v52
    %56 = vmatprep.subr.mxu0 0.0
    %57 = vmatpush1.msra.mxu0 0.0
    %58 = vmatprep.subr.mxu0 0.0
    %59 = vmatpush1.msra.mxu0 0.0
    %60 = vmatprep.subr.mxu0 0.0
    %61 = vmatpush1.msra.mxu0 0.0
    %62 = vmatprep.subr.mxu0 0.0
    %63 = vmatpush1.msra.mxu0 0.0
    %64 = vmatprep.subr.mxu0 0.0
    %65 = vmatpush1.msra.mxu0 0.0
    %66 = vmatprep.subr.mxu0 0.0
    %67 = vmatpush1.msra.mxu0 0.0
    %68 = vmatprep.subr.mxu0 0.0
    %69 = vmatpush1.msra.mxu0 0.0
    %70 = vmatprep.subr.mxu0 0.0
    %71 = vmatpush1.msra.mxu0 0.0
    %72 = vmatprep.subr.mxu0 0.0
    %73 = vmatpush1.msra.mxu0 0.0
    %74 = vmatprep.subr.mxu0 0.0
    %75 = vmatpush1.msra.mxu0 0.0
    %76 = vmatprep.subr.mxu0 0.0
    %77 = vmatpush1.msra.mxu0 0.0
    %78 = vmatprep.subr.mxu0 0.0
    %79 = vmatpush1.msra.mxu0 0.0
    %80 = vmatprep.subr.mxu0 0.0
    %81 = vmatpush1.msra.mxu0 0.0
    %82 = vmatprep.subr.mxu0 0.0
    %83 = vmatpush1.msra.mxu0 0.0
    %84 = vmatprep.subr.mxu0 0.0
    %85 = vmatpush1.msra.mxu0 0.0
    %86 = vmatprep.subr.mxu0 0.0
    %87 = vmatpush1.msra.mxu0 0.0
    %88 = vmatprep.subr.mxu0 0.0
    %89 = vmatpush1.msra.mxu0 0.0
    %90 = vmatprep.subr.mxu0 0.0
    %91 = vmatpush1.msra.mxu0 0.0
    %92 = vmatprep.subr.mxu0 0.0
    %93 = vmatpush1.msra.mxu0 0.0
    %94 = vmatprep.subr.mxu0 0.0
    %95 = vmatpush1.msra.mxu0 0.0
    %96 = vmatprep.subr.mxu0 0.0
    %97 = vmatpush1.msra.mxu0 0.0
    %98 = vmatprep.subr.mxu0 0.0
    %99 = vmatpush1.msra.mxu0 0.0
    %100 = vmatprep.subr.mxu0 0.0
    %101 = vmatpush1.msra.mxu0 0.0
    %102 = vmatprep.subr.mxu0 0.0
    %103 = vmatpush1.msra.mxu0 0.0
    %104 = vmatprep.subr.mxu0 0.0
    %105 = vmatpush1.msra.mxu0 0.0
    %106 = vmatprep.subr.mxu0 0.0
    %107 = vmatpush1.msra.mxu0 0.0
    %108 = vmatprep.subr.mxu0 0.0
    %109 = vmatpush1.msra.mxu0 0.0
    %110 = vmatprep.subr.mxu0 0.0
    %111 = vmatpush1.msra.mxu0 0.0
    %112 = vmatprep.subr.mxu0 0.0
    %113 = vmatpush1.msra.mxu0 0.0
    %114 = vmatprep.subr.mxu0 0.0
    %115 = vmatpush1.msra.mxu0 0.0
    %116 = vmatprep.subr.mxu0 0.0
    %117 = vmatpush1.msra.mxu0 0.0
    %118 = vmatprep.mubr.f32.mxu0 0.0
    %119 = vmatmul.mubr.f32.gmra.mrb[0].mxu0 %v48
    %v120 = vpop.f32.mrb[0].mxu0
    %v121 = vadd.f32 %v44, %v120
    %v122 = vpop.f32.mrb[0].mxu0
    %123 = vdwg.mxu0
    %v124 = vmax.f32 %v121, 0.0
    %v125 = vld [vmem:[#allocation2] sm:$0xff]
    %v126 = vld [vmem:[#allocation2 + $0x8] sm:$0xff]
    %v127 = vld [vmem:[#allocation2 + $0x10] sm:$0xff]
    %v128 = vld [vmem:[#allocation2 + $0x18] sm:$0xff]
    %v129 = vld [vmem:[#allocation2 + $0x20] sm:$0xff]
    %v130 = vld [vmem:[#allocation2 + $0x28] sm:$0xff]
    %v131 = vld [vmem:[#allocation2 + $0x30] sm:$0xff]
    %v132 = vld [vmem:[#allocation2 + $0x38] sm:$0xff]
    %v133 = vld [vmem:[#allocation2 + $0x40] sm:$0xff]
    %v134 = vld [vmem:[#allocation2 + $0x48] sm:$0xff]
    %v135 = vld [vmem:[#allocation2 + $0x50] sm:$0xff]
    %v136 = vld [vmem:[#allocation2 + $0x58] sm:$0xff]
    %v137 = vld [vmem:[#allocation2 + $0x60] sm:$0xff]
    %v138 = vld [vmem:[#allocation2 + $0x68] sm:$0xff]
    %v139 = vld [vmem:[#allocation2 + $0x70] sm:$0xff]
    %v140 = vld [vmem:[#allocation2 + $0x78] sm:$0xff]
    %v141 = vld [vmem:[%s5] sm:$0x1]
    %v143 = vlaneseq
    %v144 = vshrl.u32 %v143, 7
    %v145 = vsub.s32 0, %v144
    %v146 = vrot.slane %v141, %v145
    %148 = vmatprep.subr.mxu0 0.0
    %149 = vmatpush1.msra.mxu0 %v125
    %150 = vmatprep.subr.mxu0 0.0
    %151 = vmatpush1.msra.mxu0 %v126
    %152 = vmatprep.subr.mxu0 0.0
    %153 = vmatpush1.msra.mxu0 %v127
    %154 = vmatprep.subr.mxu0 0.0
    %155 = vmatpush1.msra.mxu0 %v128
    %156 = vmatprep.subr.mxu0 0.0
    %157 = vmatpush1.msra.mxu0 %v129
    %158 = vmatprep.subr.mxu0 0.0
    %159 = vmatpush1.msra.mxu0 %v130
    %160 = vmatprep.subr.mxu0 0.0
    %161 = vmatpush1.msra.mxu0 %v131
    %162 = vmatprep.subr.mxu0 0.0
    %163 = vmatpush1.msra.mxu0 %v132
    %164 = vmatprep.subr.mxu0 0.0
    %165 = vmatpush1.msra.mxu0 %v133
    %166 = vmatprep.subr.mxu0 0.0
    %167 = vmatpush1.msra.mxu0 %v134
    %168 = vmatprep.subr.mxu0 0.0
    %169 = vmatpush1.msra.mxu0 %v135
    %170 = vmatprep.subr.mxu0 0.0
    %171 = vmatpush1.msra.mxu0 %v136
    %172 = vmatprep.subr.mxu0 0.0
    %173 = vmatpush1.msra.mxu0 %v137
    %174 = vmatprep.subr.mxu0 0.0
    %175 = vmatpush1.msra.mxu0 %v138
    %176 = vmatprep.subr.mxu0 0.0
    %177 = vmatpush1.msra.mxu0 %v139
    %178 = vmatprep.subr.mxu0 0.0
    %179 = vmatpush1.msra.mxu0 %v140
    %180 = vmatprep.subr.mxu0 0.0
    %181 = vmatpush1.msra.mxu0 0.0
    %182 = vmatprep.subr.mxu0 0.0
    %183 = vmatpush1.msra.mxu0 0.0
    %184 = vmatprep.subr.mxu0 0.0
    %185 = vmatpush1.msra.mxu0 0.0
    %186 = vmatprep.subr.mxu0 0.0
    %187 = vmatpush1.msra.mxu0 0.0
    %188 = vmatprep.subr.mxu0 0.0
    %189 = vmatpush1.msra.mxu0 0.0
    %190 = vmatprep.subr.mxu0 0.0
    %191 = vmatpush1.msra.mxu0 0.0
    %192 = vmatprep.subr.mxu0 0.0
    %193 = vmatpush1.msra.mxu0 0.0
    %194 = vmatprep.subr.mxu0 0.0
    %195 = vmatpush1.msra.mxu0 0.0
    %196 = vmatprep.subr.mxu0 0.0
    %197 = vmatpush1.msra.mxu0 0.0
    %198 = vmatprep.subr.mxu0 0.0
    %199 = vmatpush1.msra.mxu0 0.0
    %200 = vmatprep.subr.mxu0 0.0
    %201 = vmatpush1.msra.mxu0 0.0
    %202 = vmatprep.subr.mxu0 0.0
    %203 = vmatpush1.msra.mxu0 0.0
    %204 = vmatprep.subr.mxu0 0.0
    %205 = vmatpush1.msra.mxu0 0.0
    %206 = vmatprep.subr.mxu0 0.0
    %207 = vmatpush1.msra.mxu0 0.0
    %208 = vmatprep.subr.mxu0 0.0
    %209 = vmatpush1.msra.mxu0 0.0
    %210 = vmatprep.subr.mxu0 0.0
    %211 = vmatpush1.msra.mxu0 0.0
    %212 = vmatprep.mubr.f32.mxu0 0.0
    %213 = vmatmul.mubr.f32.gmra.mrb[0].mxu0 %v124
    %v214 = vpop.f32.mrb[0].mxu0
    %v215 = vadd.f32 %v146, %v214
    %v216 = vpop.f32.mrb[0].mxu0
    %217 = vdwg.mxu0
    %v218 = vlaneseq
    %v219 = vand.u32 %v218, 127
    %v220 = vld [vmem:[%s1] sm:$0xff]
    %221 = vset.pattern.permute.xlu0 0
    %222 = vperm.xlu0 %221, %v220
    %v223 = vpop.permute.xlu0 %222
    %vm224 = vcmp.eq.s32.totalorder %v219, %v223
    %v225 = vsel %vm224, %v215, 0.0
    %226 = vadd.xlane.f32.xlu0 %v225
    %v227 = vpop.xlane.xlu0 %226
    %vm228 = vcmask 7168
    %229 = vst.msk [vmem:[%s6] sm:$0xff] %vm228, %v227
    // Predicated region
    $region30: #{tpu_custom_call.1} parent=1 // pred_check
      _
    $region31: #{tpu_custom_call.1} parent=1 // pred_check_branch
      %231 = sbr.rel (0) target = $region33
    $region32: #{tpu_custom_call.1} parent=1 // pred_region
      _
    $region33: #{tpu_custom_call.1} parent=1 // pred_fallthru
      _
    // Predicated region
    $region34: #{tpu_custom_call.1} parent=1 // pred_check
      _
    $region35: #{tpu_custom_call.1} parent=1 // pred_check_branch
      %233 = sbr.rel (0) target = $region37
    $region36: #{tpu_custom_call.1} parent=1 // pred_region
      _
    $region37: #{tpu_custom_call.1} parent=1 // pred_fallthru
      _
    %234 = vsyncpa [#allocation3], 1

</llo_original>
